<compile_context>
chip_gen: v7x
topology: tpu7x:2x2x1
jax: 0.10.0
libtpu: 0.0.40
codegen_flags: <defaults>
</compile_context>

<pallas_src>
import functools
import numpy as np

import jax
import jax.numpy as jnp
from jax.experimental import pallas as pl
from jax.experimental.pallas import tpu as pltpu


def _round_up(x, m):
    return (x + m - 1) // m * m


def _mask_embedding_kernel(idx_ref, tbl_ref, out_ref, acc_ref, *,
                           temp, ticket, scaling, d_pad):
    """One grid step: TN tokens x one TF-row slice of the fused table.

    idx_ref: (TN, 1)     int32 flattened token indices
    tbl_ref: (TF, Dt)    fused table slice: cols [0:D] embedding, col d_pad is
                         the mask weight, remaining cols zero (Dt = d_pad + 128)
    out_ref: (TN, d_pad) masked / scaled embedding (lane-dense)
    acc_ref: (TN, Dt)    f32 VMEM accumulator, resident across the feature axis
    """
    j = pl.program_id(1)
    nj = pl.num_programs(1)
    tn = idx_ref.shape[0]
    tf = tbl_ref.shape[0]

    @pl.when(j == 0)
    def _():
        acc_ref[...] = jnp.zeros_like(acc_ref)

    idx = idx_ref[...]                                            # (TN, 1)
    col = jax.lax.broadcasted_iota(jnp.int32, (tn, tf), 1) + j * tf
    onehot = (col == idx).astype(tbl_ref.dtype)                   # (TN, TF)

    # Single fused gather on the MXU: embedding rows + mask-weight column,
    # accumulated over feature blocks (exactly one block matches per token).
    acc_ref[...] += jnp.dot(onehot, tbl_ref[...],
                            preferred_element_type=jnp.float32)   # (TN, Dt)

    @pl.when(j == nj - 1)
    def _():
        res = acc_ref[...]
        embed = res[:, :d_pad]                                    # tile-aligned
        mw = res[:, d_pad:d_pad + 1]                              # (TN, 1)
        if ticket:
            m = jnp.where(mw > 0.0, scaling, 0.0)
        else:
            m = scaling * jax.nn.sigmoid(temp * mw)               # EUP, f32
        out_ref[...] = (embed * m).astype(out_ref.dtype)


def mask_embedding_forward(x, embedding, mask_weight, *,
                           temp=1.0, ticket=False, mask_initial_value=0.0,
                           block_tokens=512, block_features=1024):
    """x: integer indices (any shape); embedding: (F, D); mask_weight: (F, 1) or (F,).

    Returns an array of shape x.shape + (D,) with embedding's dtype.
    """
    # TODO(synk): for extremely large vocabularies (F >> ~32K) a scalar-prefetched
    # DMA row gather beats the blocked one-hot MXU gather (flops scale with F).
    feat, dim = embedding.shape
    lead_shape = tuple(x.shape)
    n = int(np.prod(lead_shape)) if lead_shape else 1

    d_pad = _round_up(dim, 128)        # lane-dense output width
    d_tot = d_pad + 128                # extra lane tile carries the mask column

    dtype = embedding.dtype
    itemsize = np.dtype(dtype).itemsize

    # Token blocking.
    tn = min(int(block_tokens), _round_up(n, 8))
    tn = _round_up(tn, 8)
    n_pad = _round_up(n, tn)

    # Feature (vocabulary) blocking — reduction axis, kept last in the grid.
    tf = min(int(block_features), _round_up(feat, 128))
    tf = _round_up(tf, 128)
    f_pad = _round_up(feat, tf)

    grid = (n_pad // tn, f_pad // tf)

    # Fused, padded table: [:, :D] = embedding, [:, d_pad] = mask weight.
    tbl = jnp.zeros((f_pad, d_tot), dtype=dtype)
    tbl = tbl.at[:feat, :dim].set(embedding.astype(dtype))
    tbl = tbl.at[:feat, d_pad].set(jnp.reshape(mask_weight, (feat,)).astype(dtype))

    idx = jnp.zeros((n_pad, 1), dtype=jnp.int32)
    idx = idx.at[:n, 0].set(jnp.reshape(x, (n,)).astype(jnp.int32))

    # 1 / sigmoid(mask_initial_value)
    scaling = float(1.0 + np.exp(-float(mask_initial_value)))

    kernel = functools.partial(
        _mask_embedding_kernel,
        temp=float(temp), ticket=bool(ticket), scaling=scaling, d_pad=d_pad)

    cost = pl.CostEstimate(
        flops=2 * n_pad * f_pad * d_tot,
        transcendentals=0 if ticket else n_pad,
        bytes_accessed=((n_pad // tn) * f_pad * d_tot * itemsize   # table blocks
                        + n_pad * 4                                # indices
                        + n_pad * d_pad * itemsize))               # output

    # Per-step VMEM budget: double-buffered table / idx / out blocks + the f32
    # accumulator + one-hot and matmul-result temporaries.
    vmem_need = (2 * tf * d_tot * itemsize          # table blocks (x2 buffers)
                 + 2 * tn * 128 * 4                 # idx blocks (lane-padded)
                 + 2 * tn * d_pad * itemsize        # output blocks
                 + tn * d_tot * 4                   # accumulator scratch
                 + tn * tf * itemsize               # one-hot temporary
                 + tn * d_tot * 4)                  # matmul result temporary
    vmem_limit = int(min(64 * 1024 * 1024, max(16 * 1024 * 1024, 2 * vmem_need)))

    out_pad = pl.pallas_call(
        kernel,
        out_shape=jax.ShapeDtypeStruct((n_pad, d_pad), dtype),
        grid=grid,
        in_specs=[
            pl.BlockSpec((tn, 1), lambda i, j: (i, 0)),       # token indices
            pl.BlockSpec((tf, d_tot), lambda i, j: (j, 0)),   # table slice
        ],
        out_specs=pl.BlockSpec((tn, d_pad), lambda i, j: (i, 0)),
        scratch_shapes=[pltpu.VMEM((tn, d_tot), jnp.float32)],
        compiler_params=pltpu.CompilerParams(
            dimension_semantics=("parallel", "arbitrary"),
            vmem_limit_bytes=vmem_limit),
        cost_estimate=cost,
    )(idx, tbl)

    out = out_pad[:n, :dim]
    return out.reshape(lead_shape + (dim,))


def _reference(x, embedding, mask_weight, *, temp=1.0, ticket=False,
               mask_initial_value=0.0):
    scaling = 1.0 + np.exp(-float(mask_initial_value))
    embed = embedding[x]                                   # (..., D)
    mw = jnp.reshape(mask_weight, (-1,))[x][..., None]     # (..., 1)
    if ticket:
        mask = (mw > 0.0).astype(jnp.float32)
    else:
        mask = jax.nn.sigmoid(temp * mw)
    return embed * (scaling * mask)


if __name__ == "__main__":
    feature_num = 16
    latent_dim = 32
    batch = 2
    seq = 8
    mask_initial_value = 0.0
    temp = 1.0

    key = jax.random.PRNGKey(0)
    k_emb, k_x, k_mw, k_emb2, k_x2, k_mw2 = jax.random.split(key, 6)

    # Deterministic parameter init matching the nn.Module __init__:
    #   embedding: xavier_uniform_((feature_num, latent_dim))
    #   mask_weight: constant(mask_initial_value), shape (feature_num, 1)
    limit = float(np.sqrt(6.0 / (feature_num + latent_dim)))
    embedding = jax.random.uniform(
        k_emb, (feature_num, latent_dim),
        minval=-limit, maxval=limit, dtype=jnp.float32)
    mask_weight = jnp.full((feature_num, 1), mask_initial_value,
                           dtype=jnp.float32)
    x = jax.random.randint(k_x, (batch, seq), 0, feature_num, dtype=jnp.int32)

    # Default module forward (soft mask).
    out = mask_embedding_forward(
        x, embedding, mask_weight,
        temp=temp, ticket=False, mask_initial_value=mask_initial_value)
    out = jax.block_until_ready(out)
    ref = _reference(x, embedding, mask_weight, temp=temp, ticket=False,
                     mask_initial_value=mask_initial_value)
    assert out.shape == (batch, seq, latent_dim)
    np.testing.assert_allclose(np.asarray(out), np.asarray(ref),
                               rtol=1e-5, atol=1e-5)

    # Non-trivial mask weights: both soft and ticket (hard-threshold) paths.
    mask_weight2 = jax.random.normal(k_mw, (feature_num, 1), dtype=jnp.float32)
    for ticket in (False, True):
        out2 = jax.block_until_ready(
            mask_embedding_forward(
                x, embedding, mask_weight2, temp=0.5, ticket=ticket,
                mask_initial_value=mask_initial_value))
        ref2 = _reference(x, embedding, mask_weight2, temp=0.5, ticket=ticket,
                          mask_initial_value=mask_initial_value)
        np.testing.assert_allclose(np.asarray(out2), np.asarray(ref2),
                                   rtol=1e-5, atol=1e-5)

    # Exercise the blocked-vocabulary (feature-reduction) path: feature_num=200
    # with block_features=128 -> 2 feature blocks accumulated in the kernel.
    feat_big = 200
    limit_b = float(np.sqrt(6.0 / (feat_big + latent_dim)))
    embedding_b = jax.random.uniform(
        k_emb2, (feat_big, latent_dim),
        minval=-limit_b, maxval=limit_b, dtype=jnp.float32)
    mask_weight_b = jax.random.normal(k_mw2, (feat_big, 1), dtype=jnp.float32)
    x_b = jax.random.randint(k_x2, (batch, seq), 0, feat_big, dtype=jnp.int32)
    out_b = jax.block_until_ready(
        mask_embedding_forward(
            x_b, embedding_b, mask_weight_b, temp=2.0, ticket=False,
            mask_initial_value=mask_initial_value, block_features=128))
    ref_b = _reference(x_b, embedding_b, mask_weight_b, temp=2.0, ticket=False,
                       mask_initial_value=mask_initial_value)
    np.testing.assert_allclose(np.asarray(out_b), np.asarray(ref_b),
                               rtol=1e-5, atol=1e-5)

    print("KERNEL_OK")
</pallas_src>

<mosaic_0001>
module attributes {stable_mosaic.version = 11 : i64} {
  func.func @_mask_embedding_kernel(%arg0: i32, %arg1: i32, %arg2: memref<16x1xi32, #tpu.memory_space<vmem>>, %arg3: memref<128x256xf32, #tpu.memory_space<vmem>>, %arg4: memref<16x128xf32, #tpu.memory_space<vmem>>, %arg5: memref<16x256xf32, #tpu.memory_space<vmem>>) attributes {dimension_semantics = [#tpu.dimension_semantics<parallel>, #tpu.dimension_semantics<arbitrary>], iteration_bounds = array<i64: 1, 1>, scalar_prefetch = 0 : i64, scratch_operands = 1 : i64, tpu.core_type = #tpu.core_type<tc>, window_params = [{transform_indices = @transform_0, window_bounds = array<i64: 16, 1>}, {transform_indices = @transform_1, window_bounds = array<i64: 128, 256>}, {transform_indices = @transform_2, window_bounds = array<i64: 16, 128>}]} {
    %c0_i32 = arith.constant 0 : i32
    %0 = arith.cmpi eq, %arg1, %c0_i32 : i32
    %1 = arith.extui %0 : i1 to i32
    %c0_i32_0 = arith.constant 0 : i32
    %2 = arith.cmpi ne, %1, %c0_i32_0 : i32
    scf.if %2 {
      %cst_10 = arith.constant 0.000000e+00 : f32
      %20 = vector.broadcast %cst_10 : f32 to vector<16x256xf32>
      %c0_11 = arith.constant 0 : index
      %c0_12 = arith.constant 0 : index
      %21 = vector.load %arg5[%c0_11, %c0_12] : memref<16x256xf32, #tpu.memory_space<vmem>>, vector<16x256xf32>
      tpu.vector_store %arg5[%c0_11, %c0_12], %20 {strides = array<i32>} : memref<16x256xf32, #tpu.memory_space<vmem>>, vector<16x256xf32>,
    } else {
    }
    %c0 = arith.constant 0 : index
    %c0_1 = arith.constant 0 : index
    %3 = vector.load %arg2[%c0, %c0_1] : memref<16x1xi32, #tpu.memory_space<vmem>>, vector<16x1xi32>
    %4 = tpu.iota {dimensions = array<i32: 1>} : vector<16x128xi32>
    %c128_i32 = arith.constant 128 : i32
    %5 = arith.muli %arg1, %c128_i32 : i32
    %6 = vector.broadcast %5 : i32 to vector<16x128xi32>
    %7 = arith.addi %4, %6 : vector<16x128xi32>
    %8 = vector.broadcast %3 : vector<16x1xi32> to vector<16x128xi32>
    %9 = arith.cmpi eq, %7, %8 : vector<16x128xi32>
    %10 = arith.extui %9 : vector<16x128xi1> to vector<16x128xi32>
    %11 = arith.sitofp %10 : vector<16x128xi32> to vector<16x128xf32>
    %c0_2 = arith.constant 0 : index
    %c0_3 = arith.constant 0 : index
    %12 = vector.load %arg5[%c0_2, %c0_3] : memref<16x256xf32, #tpu.memory_space<vmem>>, vector<16x256xf32>
    %c0_4 = arith.constant 0 : index
    %c0_5 = arith.constant 0 : index
    %13 = vector.load %arg3[%c0_4, %c0_5] : memref<128x256xf32, #tpu.memory_space<vmem>>, vector<128x256xf32>
    %cst = arith.constant dense<0.000000e+00> : vector<16x256xf32>
    %14 = tpu.matmul %11, %13, %cst {dimension_numbers = #tpu.dot_dimension_numbers<[1], [0], [0], [1], [0, 0, 1, 1], [], []>} : vector<16x128xf32>, vector<128x256xf32>, vector<16x256xf32> -> vector<16x256xf32>
    %15 = arith.addf %12, %14 : vector<16x256xf32>
    %c0_6 = arith.constant 0 : index
    %c0_7 = arith.constant 0 : index
    %16 = vector.load %arg5[%c0_6, %c0_7] : memref<16x256xf32, #tpu.memory_space<vmem>>, vector<16x256xf32>
    tpu.vector_store %arg5[%c0_6, %c0_7], %15 {strides = array<i32>} : memref<16x256xf32, #tpu.memory_space<vmem>>, vector<16x256xf32>,
    %c0_i32_8 = arith.constant 0 : i32
    %17 = arith.cmpi eq, %arg1, %c0_i32_8 : i32
    %18 = arith.extui %17 : i1 to i32
    %c0_i32_9 = arith.constant 0 : i32
    %19 = arith.cmpi ne, %18, %c0_i32_9 : i32
    scf.if %19 {
      %c0_10 = arith.constant 0 : index
      %c0_11 = arith.constant 0 : index
      %20 = vector.load %arg5[%c0_10, %c0_11] : memref<16x256xf32, #tpu.memory_space<vmem>>, vector<16x256xf32>
      %21 = vector.extract_strided_slice %20 {offsets = [0, 0], sizes = [16, 128], strides = [1, 1]} : vector<16x256xf32> to vector<16x128xf32>
      %22 = vector.extract_strided_slice %20 {offsets = [0, 128], sizes = [16, 1], strides = [1, 1]} : vector<16x256xf32> to vector<16x1xf32>
      %cst_12 = arith.constant 1.000000e+00 : f32
      %23 = vector.broadcast %cst_12 : f32 to vector<16x1xf32>
      %24 = arith.mulf %23, %22 : vector<16x1xf32>
      %25 = arith.negf %24 : vector<16x1xf32>
      %26 = math.exp %25 : vector<16x1xf32>
      %cst_13 = arith.constant 1.000000e+00 : f32
      %27 = vector.broadcast %cst_13 : f32 to vector<16x1xf32>
      %28 = arith.addf %27, %26 : vector<16x1xf32>
      %29 = arith.divf %27, %28 : vector<16x1xf32>
      %cst_14 = arith.constant 2.000000e+00 : f32
      %30 = vector.broadcast %cst_14 : f32 to vector<16x1xf32>
      %31 = arith.mulf %30, %29 : vector<16x1xf32>
      %32 = vector.broadcast %31 : vector<16x1xf32> to vector<16x128xf32>
      %33 = arith.mulf %21, %32 : vector<16x128xf32>
      %c0_15 = arith.constant 0 : index
      %c0_16 = arith.constant 0 : index
      %34 = vector.load %arg4[%c0_15, %c0_16] : memref<16x128xf32, #tpu.memory_space<vmem>>, vector<16x128xf32>
      tpu.vector_store %arg4[%c0_15, %c0_16], %33 {strides = array<i32>} : memref<16x128xf32, #tpu.memory_space<vmem>>, vector<16x128xf32>,
    } else {
    }
    return
  }
  func.func @transform_0(%arg0: i32, %arg1: i32) -> (i32, i32) {
    %c0_i32 = arith.constant 0 : i32
    %c0_i32_0 = arith.constant 0 : i32
    return %arg0, %c0_i32 : i32, i32
  }
  func.func @transform_1(%arg0: i32, %arg1: i32) -> (i32, i32) {
    %c0_i32 = arith.constant 0 : i32
    %c0_i32_0 = arith.constant 0 : i32
    return %arg1, %c0_i32 : i32, i32
  }
  func.func @transform_2(%arg0: i32, %arg1: i32) -> (i32, i32) {
    %c0_i32 = arith.constant 0 : i32
    %c0_i32_0 = arith.constant 0 : i32
    return %arg0, %c0_i32 : i32, i32
  }
}

</mosaic_0001>

<llo_original>
// kernel: tpu_custom_call.1
$region0: #{tpu_custom_call.1}
  #allocation0 [shape = 'u32[]', space=smem, size = 0x4, offset = 0x4, fixed_abs, tag = 'smem constant byte address 0x4 - core index']
  #allocation1 [shape = 'u32[144,128]{1,0:T(1,128)}', space=vmem, size = 0x12000, scoped, tag = 'internal scratch']
  #allocation2 [shape = 'f32[16,256]{1,0:T(8,128)}', space=vmem, size = 0x4000, scoped, tag = 'scratch operand']
  %s0 = inlined_call_operand.vmem [shape: s32[16,1], index: 0, kind: input, shape index: {}]
  %s1 = inlined_call_operand.hbm [shape: f32[128,256], index: 1, kind: input, shape index: {}]
  %s2 = inlined_call_operand.hbm [shape: f32[16,128], index: 2, kind: output, shape index: {}]
  %s3 = sld [smem:[#allocation0]]
  $region30: #{tpu_custom_call.1} parent=0
    _
  %s5 = ssub.s32 1, %s3
  %s6 = scalar_select 0, %s5, %s3
  $region1: #{tpu_custom_call.1} parent=0
    #allocation3 [shape = 'u8[131072]{0}', space=vmem, size = 0x20000, scoped, tag = 'input window, operand 1, single buffered']
    #allocation4 [shape = 's32[1]{0}', space=sflag, size = 0x4, scoped, tag = 'scoped memory for tpu_custom_call.1']
    #allocation5 [shape = 's32[1]{0}', space=sflag, size = 0x4, scoped, tag = 'scoped memory for tpu_custom_call.1']
    #allocation6 [shape = 'u8[8192]{0}', space=vmem, size = 0x2000, scoped, tag = 'output window, operand 0, single buffered']
    %7 = vsyncpa [#allocation4], 0
    %8 = vsyncpa [#allocation5], 0
    // Predicated region
    $region2: #{tpu_custom_call.1} parent=1 // pred_check
      _
    $region3: #{tpu_custom_call.1} parent=1 // pred_check_branch
      %10 = sbr.rel (0) target = $region5
    $region4: #{tpu_custom_call.1} parent=1 // pred_region
      _
    $region5: #{tpu_custom_call.1} parent=1 // pred_fallthru
      _
    // Predicated region
    $region6: #{tpu_custom_call.1} parent=1 // pred_check
      _
    $region7: #{tpu_custom_call.1} parent=1 // pred_check_branch
      %12 = sbr.rel (0) target = $region9
    $region8: #{tpu_custom_call.1} parent=1 // pred_region
      %s14 = ssub.s32 4096, 4096
      %15 = vsyncadd [#allocation4], %s14
      %s16 = sshll.u32 [#allocation3], 4
      %s17 = int_to_ptr.vmem [resolvable:$true] %s16
      %22 = dma.hbm_to_vmem [thread:$0]  %s1, 4096, %s17, [#allocation4], 256, 256, 16
    $region9: #{tpu_custom_call.1} parent=1 // pred_fallthru
      _
    // Predicated region
    $region10: #{tpu_custom_call.1} parent=1 // pred_check
      _
    $region11: #{tpu_custom_call.1} parent=1 // pred_check_branch
      %24 = sbr.rel (0) target = $region13
    $region12: #{tpu_custom_call.1} parent=1 // pred_region
      %25 = dma.done [#allocation4], 4096
    $region13: #{tpu_custom_call.1} parent=1 // pred_fallthru
      _
    %p26 = scmp.eq.s32.totalorder 0, 0
    // Predicated region
    $region14: #{tpu_custom_call.1} parent=1 // pred_check
      %p27 = pneg %p26
    $region15: #{tpu_custom_call.1} parent=1 // pred_check_branch
      %29 = sbr.rel (%p27) target = $region17
    $region16: #{tpu_custom_call.1} parent=1 // pred_region
      %30 = vst [vmem:[#allocation2] sm:$0xff] 0.0
      %31 = vst [vmem:[#allocation2 + $0x8] sm:$0xff] 0.0
      %32 = vst [vmem:[#allocation2 + $0x10] sm:$0xff] 0.0
      %33 = vst [vmem:[#allocation2 + $0x18] sm:$0xff] 0.0
    $region17: #{tpu_custom_call.1} parent=1 // pred_fallthru
      _
    %v34 = vld [vmem:[%s0] sm:$0xff]
    %v35 = vld [vmem:[%s0 + $0x8] sm:$0xff]
    %v36 = vlaneseq
    %v37 = vand.u32 %v36, 127
    %s38 = smul.u32 0, 128
    %v39 = vstv %s38
    %v40 = vadd.s32 %v37, %v39
    %41 = vset.pattern.permute.xlu0 0
    %42 = vperm.xlu0 %41, %v34
    %v43 = vpop.permute.xlu0 %42
    %44 = vset.pattern.permute.xlu0 0
    %45 = vperm.xlu0 %44, %v35
    %v46 = vpop.permute.xlu0 %45
    %vm47 = vcmp.eq.s32.totalorder %v40, %v43
    %vm48 = vcmp.eq.s32.totalorder %v40, %v46
    %v49 = vsel %vm47, 1, 0
    %v50 = vsel %vm48, 1, 0
    %v51 = vcvt.s32.f32 %v49
    %v52 = vcvt.s32.f32 %v50
    %v53 = vld [vmem:[#allocation2] sm:$0xff]
    %v54 = vld [vmem:[#allocation2 + $0x8] sm:$0xff]
    %v55 = vld [vmem:[#allocation2 + $0x10] sm:$0xff]
    %v56 = vld [vmem:[#allocation2 + $0x18] sm:$0xff]
    %v57 = vld [vmem:[#allocation3] sm:$0xff]
    %v58 = vld [vmem:[#allocation3 + $0x8] sm:$0xff]
    %v59 = vld [vmem:[#allocation3 + $0x10] sm:$0xff]
    %v60 = vld [vmem:[#allocation3 + $0x18] sm:$0xff]
    %v61 = vld [vmem:[#allocation3 + $0x20] sm:$0xff]
    %v62 = vld [vmem:[#allocation3 + $0x28] sm:$0xff]
    %v63 = vld [vmem:[#allocation3 + $0x30] sm:$0xff]
    %v64 = vld [vmem:[#allocation3 + $0x38] sm:$0xff]
    %v65 = vld [vmem:[#allocation3 + $0x40] sm:$0xff]
    %v66 = vld [vmem:[#allocation3 + $0x48] sm:$0xff]
    %v67 = vld [vmem:[#allocation3 + $0x50] sm:$0xff]
    %v68 = vld [vmem:[#allocation3 + $0x58] sm:$0xff]
    %v69 = vld [vmem:[#allocation3 + $0x60] sm:$0xff]
    %v70 = vld [vmem:[#allocation3 + $0x68] sm:$0xff]
    %v71 = vld [vmem:[#allocation3 + $0x70] sm:$0xff]
    %v72 = vld [vmem:[#allocation3 + $0x78] sm:$0xff]
    %v73 = vld [vmem:[#allocation3 + $0x80] sm:$0xff]
    %v74 = vld [vmem:[#allocation3 + $0x88] sm:$0xff]
    %v75 = vld [vmem:[#allocation3 + $0x90] sm:$0xff]
    %v76 = vld [vmem:[#allocation3 + $0x98] sm:$0xff]
    %v77 = vld [vmem:[#allocation3 + $0xa0] sm:$0xff]
    %v78 = vld [vmem:[#allocation3 + $0xa8] sm:$0xff]
    %v79 = vld [vmem:[#allocation3 + $0xb0] sm:$0xff]
    %v80 = vld [vmem:[#allocation3 + $0xb8] sm:$0xff]
    %v81 = vld [vmem:[#allocation3 + $0xc0] sm:$0xff]
    %v82 = vld [vmem:[#allocation3 + $0xc8] sm:$0xff]
    %v83 = vld [vmem:[#allocation3 + $0xd0] sm:$0xff]
    %v84 = vld [vmem:[#allocation3 + $0xd8] sm:$0xff]
    %v85 = vld [vmem:[#allocation3 + $0xe0] sm:$0xff]
    %v86 = vld [vmem:[#allocation3 + $0xe8] sm:$0xff]
    %v87 = vld [vmem:[#allocation3 + $0xf0] sm:$0xff]
    %v88 = vld [vmem:[#allocation3 + $0xf8] sm:$0xff]
    %89 = vmatprep.subr.mxu0 %v58
    %90 = vmatpush1.msra.mxu0 %v57
    %91 = vmatprep.subr.mxu0 %v60
    %92 = vmatpush1.msra.mxu0 %v59
    %93 = vmatprep.subr.mxu0 %v62
    %94 = vmatpush1.msra.mxu0 %v61
    %95 = vmatprep.subr.mxu0 %v64
    %96 = vmatpush1.msra.mxu0 %v63
    %97 = vmatprep.subr.mxu0 %v66
    %98 = vmatpush1.msra.mxu0 %v65
    %99 = vmatprep.subr.mxu0 %v68
    %100 = vmatpush1.msra.mxu0 %v67
    %101 = vmatprep.subr.mxu0 %v70
    %102 = vmatpush1.msra.mxu0 %v69
    %103 = vmatprep.subr.mxu0 %v72
    %104 = vmatpush1.msra.mxu0 %v71
    %105 = vmatprep.subr.mxu0 %v74
    %106 = vmatpush1.msra.mxu0 %v73
    %107 = vmatprep.subr.mxu0 %v76
    %108 = vmatpush1.msra.mxu0 %v75
    %109 = vmatprep.subr.mxu0 %v78
    %110 = vmatpush1.msra.mxu0 %v77
    %111 = vmatprep.subr.mxu0 %v80
    %112 = vmatpush1.msra.mxu0 %v79
    %113 = vmatprep.subr.mxu0 %v82
    %114 = vmatpush1.msra.mxu0 %v81
    %115 = vmatprep.subr.mxu0 %v84
    %116 = vmatpush1.msra.mxu0 %v83
    %117 = vmatprep.subr.mxu0 %v86
    %118 = vmatpush1.msra.mxu0 %v85
    %119 = vmatprep.subr.mxu0 %v88
    %120 = vmatpush1.msra.mxu0 %v87
    %121 = vmatprep.subr.mxu0 0.0
    %122 = vmatpush1.msra.mxu0 0.0
    %123 = vmatprep.subr.mxu0 0.0
    %124 = vmatpush1.msra.mxu0 0.0
    %125 = vmatprep.subr.mxu0 0.0
    %126 = vmatpush1.msra.mxu0 0.0
    %127 = vmatprep.subr.mxu0 0.0
    %128 = vmatpush1.msra.mxu0 0.0
    %129 = vmatprep.subr.mxu0 0.0
    %130 = vmatpush1.msra.mxu0 0.0
    %131 = vmatprep.subr.mxu0 0.0
    %132 = vmatpush1.msra.mxu0 0.0
    %133 = vmatprep.subr.mxu0 0.0
    %134 = vmatpush1.msra.mxu0 0.0
    %135 = vmatprep.subr.mxu0 0.0
    %136 = vmatpush1.msra.mxu0 0.0
    %137 = vmatprep.subr.mxu0 0.0
    %138 = vmatpush1.msra.mxu0 0.0
    %139 = vmatprep.subr.mxu0 0.0
    %140 = vmatpush1.msra.mxu0 0.0
    %141 = vmatprep.subr.mxu0 0.0
    %142 = vmatpush1.msra.mxu0 0.0
    %143 = vmatprep.subr.mxu0 0.0
    %144 = vmatpush1.msra.mxu0 0.0
    %145 = vmatprep.subr.mxu0 0.0
    %146 = vmatpush1.msra.mxu0 0.0
    %147 = vmatprep.subr.mxu0 0.0
    %148 = vmatpush1.msra.mxu0 0.0
    %149 = vmatprep.subr.mxu0 0.0
    %150 = vmatpush1.msra.mxu0 0.0
    %151 = vmatprep.subr.mxu0 0.0
    %152 = vmatpush1.msra.mxu0 0.0
    %153 = vmatprep.mubr.f32.mxu0 0.0
    %154 = vmatmul.mubr.f32.gmra.mrb[0].mxu0 %v51
    %v155 = vpop.f32.mrb[0].mxu0
    %v156 = vadd.f32 0.0, %v155
    %v157 = vpop.f32.mrb[0].mxu0
    %v158 = vadd.f32 0.0, %v157
    %159 = vmatprep.mubr.f32.mxu0 0.0
    %160 = vmatmul.mubr.f32.gmra.mrb[0].mxu0 %v52
    %v161 = vpop.f32.mrb[0].mxu0
    %v162 = vadd.f32 0.0, %v161
    %v163 = vpop.f32.mrb[0].mxu0
    %v164 = vadd.f32 0.0, %v163
    %165 = vdwg.mxu0
    %v166 = vadd.f32 %v53, %v156
    %v167 = vadd.f32 %v54, %v158
    %v168 = vadd.f32 %v55, %v162
    %v169 = vadd.f32 %v56, %v164
    %170 = vst [vmem:[#allocation2] sm:$0xff] %v166
    %171 = vst [vmem:[#allocation2 + $0x8] sm:$0xff] %v167
    %172 = vst [vmem:[#allocation2 + $0x10] sm:$0xff] %v168
    %173 = vst [vmem:[#allocation2 + $0x18] sm:$0xff] %v169
    // Predicated region
    $region18: #{tpu_custom_call.1} parent=1 // pred_check
      %p174 = pneg %p26
    $region19: #{tpu_custom_call.1} parent=1 // pred_check_branch
      %176 = sbr.rel (%p174) target = $region21
    $region20: #{tpu_custom_call.1} parent=1 // pred_region
      %v177 = vld [vmem:[#allocation2] sm:$0xff]
      %v178 = vld [vmem:[#allocation2 + $0x8] sm:$0xff]
      %v179 = vld [vmem:[#allocation2 + $0x10] sm:$0xff]
      %v180 = vld [vmem:[#allocation2 + $0x18] sm:$0xff]
      %v181 = vxor.u32 %v178, 2147483648
      %v182 = vxor.u32 %v180, 2147483648
      %v183 = vmul.f32 %v181, 1.442695
      %v184 = vpow.pop %v183
      %v185 = vmul.f32 %v182, 1.442695
      %v186 = vpow.pop %v185
      %v187 = vadd.f32 %v184, 1.0
      %v188 = vadd.f32 %v186, 1.0
      %v189 = vrcp.pop %v187
      %v190 = vmul.f32 1.0, %v189
      %v191 = vrcp.pop %v188
      %v192 = vmul.f32 1.0, %v191
      %v193 = vmul.f32 %v190, 2.0
      %v194 = vmul.f32 %v192, 2.0
      %196 = vset.pattern.permute.xlu0 0
      %197 = vperm.xlu0 %196, %v193
      %v198 = vpop.permute.xlu0 %197
      %201 = vset.pattern.permute.xlu0 0
      %202 = vperm.xlu0 %201, %v194
      %v203 = vpop.permute.xlu0 %202
      %v205 = vmul.f32 %v177, %v198
      %v206 = vmul.f32 %v179, %v203
      %207 = vst [vmem:[#allocation6] sm:$0xff] %v205
      %208 = vst [vmem:[#allocation6 + $0x8] sm:$0xff] %v206
    $region21: #{tpu_custom_call.1} parent=1 // pred_fallthru
      _
    // Predicated region
    $region22: #{tpu_custom_call.1} parent=1 // pred_check
      _
    $region23: #{tpu_custom_call.1} parent=1 // pred_check_branch
      %210 = sbr.rel (0) target = $region25
    $region24: #{tpu_custom_call.1} parent=1 // pred_region
      %s212 = ssub.s32 256, 256
      %213 = vsyncadd [#allocation5], %s212
      %s214 = sshll.u32 [#allocation6], 4
      %s215 = int_to_ptr.vmem [resolvable:$true] %s214
      %220 = dma.vmem_to_hbm [thread:$0]  %s215, 256, %s2, [#allocation5], 128, 128, 8
    $region25: #{tpu_custom_call.1} parent=1 // pred_fallthru
      _
    // Predicated region
    $region26: #{tpu_custom_call.1} parent=1 // pred_check
      _
    $region27: #{tpu_custom_call.1} parent=1 // pred_check_branch
      %222 = sbr.rel (0) target = $region29
    $region28: #{tpu_custom_call.1} parent=1 // pred_region
      %223 = dma.done [#allocation5], 256
    $region29: #{tpu_custom_call.1} parent=1 // pred_fallthru
      _
    %224 = vsyncpa [#allocation4], 1
    %225 = vsyncpa [#allocation5], 1

</llo_original>
